<compile_context>
chip_gen: v5e
topology: v5e:2x2
jax: 0.10.0
libtpu: 0.0.40
codegen_flags: <defaults>
</compile_context>

<pallas_src>
import functools

import jax
import jax.numpy as jnp
from jax.experimental import pallas as pl
from jax.experimental.pallas import tpu as pltpu

_LANE = 128
_SUB = 8


def _round_up(n: int, m: int) -> int:
    return -(-n // m) * m


def _num_tensorcores() -> int:
    """Best-effort detection of TensorCores per chip (v7x has 2, v5e/v6e 1)."""
    try:
        d = jax.devices()[0]
        kind = (getattr(d, "device_kind", "") or "").lower()
        if "v7" in kind:
            return 2
    except Exception:
        pass
    return 1


def make_policy_kernel(layer_rows, head_rows: int, compute_dtype):
    """layer_rows: tuple of (row_start, in_rows, out_cols) describing where each
    layer's weight lives inside the packed bf16 weight buffer.  The last entry
    is the fused mu|std head.  Hidden layers get ReLU; the head is written back
    as raw pre-activations, transposed to (head_rows, TM) so the store is
    lane-dense and carries only the real head columns."""
    n_layers = len(layer_rows)

    def kernel(x_ref, w_ref, b_ref, out_ref):
        h = x_ref[...].astype(compute_dtype)                      # (TM, in0_pad)
        for li, (r0, in_rows, out_cols) in enumerate(layer_rows):
            w = w_ref[r0:r0 + in_rows, 0:out_cols]                # bf16, full-lane tile
            b = b_ref[li:li + 1, 0:out_cols]                      # f32 (1, out_cols)
            y = jnp.dot(h, w, preferred_element_type=jnp.float32) + b   # f32 accumulate
            if li < n_layers - 1:
                h = jnp.maximum(y, 0.0).astype(compute_dtype)     # ReLU -> bf16 MXU operand
            else:
                # Narrow transposed writeback: batch on the lane axis, only
                # head_rows (= round_up(2*action_dim, 8)) sublanes of payload
                # -> ~16x fewer HBM write bytes than a (TM, 128) f32 tile.
                # The (TM,128) transpose rides otherwise-idle XLU slots.
                out_ref[...] = y.T[0:head_rows, :]

    return kernel


def init_policy_params(key, state_dim, hidden_layers_dim, action_dim):
    """Deterministic init mimicking PyTorch Linear default (U[-1/sqrt(in), 1/sqrt(in)]).
    Weights are stored (in, out) = transpose of nn.Linear.weight."""
    params = []
    dims = [state_dim] + list(hidden_layers_dim)
    for i in range(len(hidden_layers_dim)):
        key, kw, kb = jax.random.split(key, 3)
        fan_in, fan_out = dims[i], dims[i + 1]
        bound = 1.0 / float(fan_in) ** 0.5
        params.append(jax.random.uniform(kw, (fan_in, fan_out), jnp.float32, -bound, bound))
        params.append(jax.random.uniform(kb, (fan_out,), jnp.float32, -bound, bound))
    last = hidden_layers_dim[-1]
    bound = 1.0 / float(last) ** 0.5
    for _ in range(2):  # fc_mu, fc_std
        key, kw, kb = jax.random.split(key, 3)
        params.append(jax.random.uniform(kw, (last, action_dim), jnp.float32, -bound, bound))
        params.append(jax.random.uniform(kb, (action_dim,), jnp.float32, -bound, bound))
    return params


def pack_policy_params(params, state_dim, hidden_layers_dim, action_dim,
                       pack_width, head_cols, compute_dtype):
    """Fuse fc_mu|fc_std, pad every GEMM to full 128 lanes, and pack:
      * weights -> ONE (rows, pack_width) bf16 buffer; layer 0 occupies
        round_up(state_dim, 16) rows, every later layer pack_width rows.
        Zero-padded rows/cols are inert (bias 0, ReLU(0)=0).
      * biases  -> ONE tiny (round_up(n_layers, 8), pack_width) f32 buffer so
        the bias add stays f32 (no bf16 precision loss)."""
    n_hidden = len(hidden_layers_dim)
    layers = []
    idx = 0
    for _ in range(n_hidden):
        layers.append((params[idx], params[idx + 1]))
        idx += 2
    w_mu, b_mu, w_std, b_std = params[idx], params[idx + 1], params[idx + 2], params[idx + 3]
    layers.append((jnp.concatenate([w_mu, w_std], axis=1),        # (last_hidden, 2*A)
                   jnp.concatenate([b_mu, b_std], axis=0)))       # (2*A,)

    in0_pad = _round_up(state_dim, 16)     # 16-row aligned (bf16 sublane packing)
    blocks, layer_rows, row = [], [], 0
    for li, (w, _) in enumerate(layers):
        in_real, out_real = w.shape
        in_rows = in0_pad if li == 0 else pack_width
        out_cols = head_cols if li == len(layers) - 1 else pack_width
        blk = jnp.zeros((in_rows, pack_width), jnp.float32)
        blk = blk.at[:in_real, :out_real].set(w)
        blocks.append(blk)
        layer_rows.append((row, in_rows, out_cols))
        row += in_rows
    w_packed = jnp.concatenate(blocks, axis=0).astype(compute_dtype)

    b_packed = jnp.zeros((_round_up(len(layers), _SUB), pack_width), jnp.float32)
    for li, (_, b) in enumerate(layers):
        b_packed = b_packed.at[li, :b.shape[0]].set(b)
    return w_packed, b_packed, tuple(layer_rows), in0_pad


def policy_net_reference(x, params, n_hidden):
    """Pure-JAX f32 reference (matches the PyTorch module)."""
    h = x
    idx = 0
    for _ in range(n_hidden):
        w, b = params[idx], params[idx + 1]
        idx += 2
        h = jnp.maximum(h @ w + b, 0.0)
    w_mu, b_mu, w_std, b_std = params[idx], params[idx + 1], params[idx + 2], params[idx + 3]
    mean_ = 2.0 * jnp.tanh(h @ w_mu + b_mu)
    std = jnp.logaddexp(h @ w_std + b_std, 0.0)
    return mean_, std


def policy_net_forward(x, params, hidden_layers_dim, action_dim,
                       compute_dtype=jnp.bfloat16, tm_max=8192,
                       min_pallas_batch=0):
    """Forward pass of policyNet.  Returns (mean_, std) like the PyTorch module."""
    batch, state_dim = x.shape
    n_hidden = len(hidden_layers_dim)

    # Tiny batches do not amortize the pallas_call/DMA setup overhead; callers
    # can set min_pallas_batch (~256) to dispatch them to plain XLA.  Default
    # is 0 so the Pallas kernel is always exercised here.
    if batch < min_pallas_batch:
        return policy_net_reference(x, params, n_hidden)

    head_cols = _round_up(2 * action_dim, _LANE)   # full-lane head GEMM output
    head_rows = _round_up(2 * action_dim, _SUB)    # sublane rows actually written back
    pack_width = max(head_cols, _round_up(max(hidden_layers_dim), _LANE))

    w_packed, b_packed, layer_rows, in0_pad = pack_policy_params(
        params, state_dim, hidden_layers_dim, action_dim,
        pack_width, head_cols, compute_dtype)

    # ---- Batch tiling / grid -------------------------------------------------
    pad_batch = _round_up(batch, _LANE)            # lane-dense transposed output
    num_tc = _num_tensorcores()
    n_tiles = pl.cdiv(pad_batch, tm_max)           # single step if it fits (v5e/v6e)
    if num_tc > 1 and pad_batch >= num_tc * _LANE:
        n_tiles = max(n_tiles, num_tc)             # keep both v7x TensorCores busy
    tm = _round_up(pl.cdiv(pad_batch, n_tiles), _LANE)
    pad_batch = _round_up(pad_batch, tm)
    grid = (pad_batch // tm,)

    x_c = x.astype(compute_dtype)                  # halves activation DMA bytes
    x_c = jnp.pad(x_c, ((0, pad_batch - batch), (0, in0_pad - state_dim)))

    # ---- VMEM budget (cap at 48 MiB: v7x has only 64 MiB physical VMEM) ------
    itemsize = jnp.dtype(compute_dtype).itemsize
    per_row = (2 * in0_pad * itemsize              # x tile, double-buffered
               + 2 * head_rows * 4                 # out tile (f32), double-buffered
               + pack_width * (itemsize + 4 + 4))  # h (bf16) + y (f32) + one f32 temp
    w_bytes = w_packed.shape[0] * pack_width * itemsize
    b_bytes = b_packed.shape[0] * pack_width * 4
    vmem_limit = int(min(max(tm * per_row + 2 * (w_bytes + b_bytes) + (2 << 20),
                             32 << 20),
                         48 << 20))

    dims = [state_dim] + list(hidden_layers_dim) + [2 * action_dim]
    flops = 2 * batch * sum(dims[i] * dims[i + 1] for i in range(len(dims) - 1))
    bytes_accessed = (pad_batch * in0_pad * itemsize + w_bytes + b_bytes
                      + head_rows * pad_batch * 4)

    kernel = make_policy_kernel(layer_rows, head_rows, compute_dtype)

    out = pl.pallas_call(
        kernel,
        out_shape=jax.ShapeDtypeStruct((head_rows, pad_batch), jnp.float32),
        grid=grid,
        in_specs=[
            pl.BlockSpec((tm, in0_pad), lambda i: (i, 0)),    # activations: batch-tiled
            pl.BlockSpec(w_packed.shape, lambda i: (0, 0)),   # bf16 weights: VMEM-resident
            pl.BlockSpec(b_packed.shape, lambda i: (0, 0)),   # f32 biases: VMEM-resident
        ],
        out_specs=pl.BlockSpec((head_rows, tm), lambda i: (0, i)),
        compiler_params=pltpu.CompilerParams(
            dimension_semantics=("parallel",),
            vmem_limit_bytes=vmem_limit),
        cost_estimate=pl.CostEstimate(flops=flops, transcendentals=0,
                                      bytes_accessed=bytes_accessed),
    )(x_c, w_packed, b_packed)

    # Head nonlinearities on the tiny real slices (fuse into the slice; keeps
    # all tanh/exp/log off the kernel's single EUP slot).
    head = out[:, :batch]                                        # (head_rows, batch)
    mean_ = 2.0 * jnp.tanh(head[:action_dim, :].T)               # (batch, action_dim)
    std = jnp.logaddexp(head[action_dim:2 * action_dim, :].T, 0.0)  # softplus
    return mean_, std


if __name__ == "__main__":
    # Small shapes consistent with policyNet(state_dim, hidden_layers_dim, action_dim)
    batch = 8
    state_dim = 16
    hidden_layers_dim = [32, 32]
    action_dim = 4

    key = jax.random.PRNGKey(0)
    key, kx = jax.random.split(key)
    x = jax.random.normal(kx, (batch, state_dim), dtype=jnp.float32)
    params = init_policy_params(key, state_dim, hidden_layers_dim, action_dim)

    fwd = jax.jit(functools.partial(
        policy_net_forward,
        hidden_layers_dim=hidden_layers_dim,
        action_dim=action_dim))
    mean_, std = fwd(x, params)
    jax.block_until_ready((mean_, std))

    mean_ref, std_ref = policy_net_reference(x, params, len(hidden_layers_dim))
    # bf16 matmul operands with f32 accumulation -> loosened tolerance vs f32 reference.
    assert mean_.shape == (batch, action_dim) and std.shape == (batch, action_dim)
    assert jnp.allclose(mean_, mean_ref, atol=5e-2, rtol=5e-2), "mean mismatch"
    assert jnp.allclose(std, std_ref, atol=5e-2, rtol=5e-2), "std mismatch"
    assert bool(jnp.all(std > 0.0)), "softplus output must be positive"

    print("KERNEL_OK")
</pallas_src>

<mosaic_0001>
module attributes {stable_mosaic.version = 11 : i64} {
  func.func @kernel(%arg0: i32, %arg1: memref<128x16xbf16, #tpu.memory_space<vmem>>, %arg2: memref<272x128xbf16, #tpu.memory_space<vmem>>, %arg3: memref<8x128xf32, #tpu.memory_space<vmem>>, %arg4: memref<8x128xf32, #tpu.memory_space<vmem>>) attributes {dimension_semantics = [#tpu.dimension_semantics<parallel>], iteration_bounds = array<i64: 1>, scalar_prefetch = 0 : i64, scratch_operands = 0 : i64, tpu.core_type = #tpu.core_type<tc>, window_params = [{transform_indices = @transform_0, window_bounds = array<i64: 128, 16>}, {pipeline_mode = #tpu.pipeline_mode<synchronous>, transform_indices = @transform_1, window_bounds = array<i64: 272, 128>}, {pipeline_mode = #tpu.pipeline_mode<synchronous>, transform_indices = @transform_2, window_bounds = array<i64: 8, 128>}, {transform_indices = @transform_3, window_bounds = array<i64: 8, 128>}]} {
    %c0 = arith.constant 0 : index
    %c0_0 = arith.constant 0 : index
    %0 = vector.load %arg1[%c0, %c0_0] : memref<128x16xbf16, #tpu.memory_space<vmem>>, vector<128x16xbf16>
    %c0_1 = arith.constant 0 : index
    %c0_2 = arith.constant 0 : index
    %1 = vector.load %arg2[%c0_1, %c0_2] : memref<272x128xbf16, #tpu.memory_space<vmem>>, vector<16x128xbf16>
    %c0_3 = arith.constant 0 : index
    %c0_4 = arith.constant 0 : index
    %2 = vector.load %arg3[%c0_3, %c0_4] : memref<8x128xf32, #tpu.memory_space<vmem>>, vector<1x128xf32>
    %cst = arith.constant dense<0.000000e+00> : vector<128x128xf32>
    %3 = tpu.matmul %0, %1, %cst {dimension_numbers = #tpu.dot_dimension_numbers<[1], [0], [0], [1], [0, 0, 1, 1], [], []>} : vector<128x16xbf16>, vector<16x128xbf16>, vector<128x128xf32> -> vector<128x128xf32>
    %4 = vector.broadcast %2 : vector<1x128xf32> to vector<128x128xf32>
    %5 = arith.addf %3, %4 : vector<128x128xf32>
    %cst_5 = arith.constant 0.000000e+00 : f32
    %6 = vector.broadcast %cst_5 : f32 to vector<128x128xf32>
    %7 = arith.maximumf %5, %6 : vector<128x128xf32>
    %8 = arith.truncf %7 : vector<128x128xf32> to vector<128x128xbf16>
    %c16 = arith.constant 16 : index
    %c0_6 = arith.constant 0 : index
    %9 = vector.load %arg2[%c16, %c0_6] : memref<272x128xbf16, #tpu.memory_space<vmem>>, vector<128x128xbf16>
    %c1 = arith.constant 1 : index
    %c0_7 = arith.constant 0 : index
    %10 = vector.load %arg3[%c1, %c0_7] : memref<8x128xf32, #tpu.memory_space<vmem>>, vector<1x128xf32>
    %cst_8 = arith.constant dense<0.000000e+00> : vector<128x128xf32>
    %11 = tpu.matmul %8, %9, %cst_8 {dimension_numbers = #tpu.dot_dimension_numbers<[1], [0], [0], [1], [0, 0, 1, 1], [], []>} : vector<128x128xbf16>, vector<128x128xbf16>, vector<128x128xf32> -> vector<128x128xf32>
    %12 = vector.broadcast %10 : vector<1x128xf32> to vector<128x128xf32>
    %13 = arith.addf %11, %12 : vector<128x128xf32>
    %cst_9 = arith.constant 0.000000e+00 : f32
    %14 = vector.broadcast %cst_9 : f32 to vector<128x128xf32>
    %15 = arith.maximumf %13, %14 : vector<128x128xf32>
    %16 = arith.truncf %15 : vector<128x128xf32> to vector<128x128xbf16>
    %c144 = arith.constant 144 : index
    %c0_10 = arith.constant 0 : index
    %17 = vector.load %arg2[%c144, %c0_10] : memref<272x128xbf16, #tpu.memory_space<vmem>>, vector<128x128xbf16>
    %c2 = arith.constant 2 : index
    %c0_11 = arith.constant 0 : index
    %18 = vector.load %arg3[%c2, %c0_11] : memref<8x128xf32, #tpu.memory_space<vmem>>, vector<1x128xf32>
    %cst_12 = arith.constant dense<0.000000e+00> : vector<128x128xf32>
    %19 = tpu.matmul %16, %17, %cst_12 {dimension_numbers = #tpu.dot_dimension_numbers<[1], [0], [0], [1], [0, 0, 1, 1], [], []>} : vector<128x128xbf16>, vector<128x128xbf16>, vector<128x128xf32> -> vector<128x128xf32>
    %20 = vector.broadcast %18 : vector<1x128xf32> to vector<128x128xf32>
    %21 = arith.addf %19, %20 : vector<128x128xf32>
    %22 = tpu.transpose %21, [1, 0] : vector<128x128xf32> -> vector<128x128xf32>
    %23 = vector.extract_strided_slice %22 {offsets = [0, 0], sizes = [8, 128], strides = [1, 1]} : vector<128x128xf32> to vector<8x128xf32>
    %c0_13 = arith.constant 0 : index
    %c0_14 = arith.constant 0 : index
    %24 = vector.load %arg4[%c0_13, %c0_14] : memref<8x128xf32, #tpu.memory_space<vmem>>, vector<8x128xf32>
    tpu.vector_store %arg4[%c0_13, %c0_14], %23 {strides = array<i32>} : memref<8x128xf32, #tpu.memory_space<vmem>>, vector<8x128xf32>,
    return
  }
  func.func @transform_0(%arg0: i32) -> (i32, i32) {
    %c0_i32 = arith.constant 0 : i32
    %c0_i32_0 = arith.constant 0 : i32
    return %arg0, %c0_i32 : i32, i32
  }
  func.func @transform_1(%arg0: i32) -> (i32, i32) {
    %c0_i32 = arith.constant 0 : i32
    %c0_i32_0 = arith.constant 0 : i32
    %c0_i32_1 = arith.constant 0 : i32
    return %c0_i32, %c0_i32_0 : i32, i32
  }
  func.func @transform_2(%arg0: i32) -> (i32, i32) {
    %c0_i32 = arith.constant 0 : i32
    %c0_i32_0 = arith.constant 0 : i32
    %c0_i32_1 = arith.constant 0 : i32
    return %c0_i32, %c0_i32_0 : i32, i32
  }
  func.func @transform_3(%arg0: i32) -> (i32, i32) {
    %c0_i32 = arith.constant 0 : i32
    %c0_i32_0 = arith.constant 0 : i32
    return %c0_i32, %arg0 : i32, i32
  }
}

</mosaic_0001>

<llo_original>
// kernel: policy_net_forward.1
$region0: #{policy_net_forward.1}
  #allocation0 [shape = 'u32[]', space=smem, size = 0x4, offset = 0x4, fixed_abs, tag = 'smem constant byte address 0x4 - core index']
  #allocation1 [shape = 'u32[72,128]{1,0:T(1,128)}', space=vmem, size = 0x9000, scoped, tag = 'internal scratch']
  %s0 = inlined_call_operand.vmem [shape: bf16[128,16], index: 0, kind: input, shape index: {}]
  %s1 = inlined_call_operand.vmem [shape: bf16[272,128], index: 1, kind: input, shape index: {}]
  %s2 = inlined_call_operand.vmem [shape: f32[8,128], index: 2, kind: input, shape index: {}]
  %s3 = inlined_call_operand.vmem [shape: f32[8,128], index: 3, kind: output, shape index: {}]
  %s4 = sld [smem:[#allocation0]]
  $region22: #{policy_net_forward.1} parent=0
    _
  %s6 = ssub.s32 1, %s4
  %s7 = scalar_select 0, %s6, %s4
  // Predicated region
  $region2: #{policy_net_forward.1} parent=0 // pred_check
    _
  $region3: #{policy_net_forward.1} parent=0 // pred_check_branch
    %9 = sbr.rel (0) target = $region5
  $region4: #{policy_net_forward.1} parent=0 // pred_region
    _
  $region5: #{policy_net_forward.1} parent=0 // pred_fallthru
    _
  // Predicated region
  $region6: #{policy_net_forward.1} parent=0 // pred_check
    _
  $region7: #{policy_net_forward.1} parent=0 // pred_check_branch
    %11 = sbr.rel (0) target = $region9
  $region8: #{policy_net_forward.1} parent=0 // pred_region
    _
  $region9: #{policy_net_forward.1} parent=0 // pred_fallthru
    _
  // Predicated region
  $region10: #{policy_net_forward.1} parent=0 // pred_check
    _
  $region11: #{policy_net_forward.1} parent=0 // pred_check_branch
    %13 = sbr.rel (0) target = $region13
  $region12: #{policy_net_forward.1} parent=0 // pred_region
    _
  $region13: #{policy_net_forward.1} parent=0 // pred_fallthru
    _
  %v15 = vld [vmem:[%s0] sm:$0xf]
  %v16 = vld [vmem:[%s0 + $0x4] sm:$0xf]
  %v17 = vld [vmem:[%s0 + $0x8] sm:$0xf]
  %v18 = vld [vmem:[%s0 + $0xc] sm:$0xf]
  %v19 = vld [vmem:[%s0 + $0x10] sm:$0xf]
  %v20 = vld [vmem:[%s0 + $0x14] sm:$0xf]
  %v21 = vld [vmem:[%s0 + $0x18] sm:$0xf]
  %v22 = vld [vmem:[%s0 + $0x1c] sm:$0xf]
  %v23 = vld [vmem:[%s0 + $0x20] sm:$0xf]
  %v24 = vld [vmem:[%s0 + $0x24] sm:$0xf]
  %v25 = vld [vmem:[%s0 + $0x28] sm:$0xf]
  %v26 = vld [vmem:[%s0 + $0x2c] sm:$0xf]
  %v27 = vld [vmem:[%s0 + $0x30] sm:$0xf]
  %v28 = vld [vmem:[%s0 + $0x34] sm:$0xf]
  %v29 = vld [vmem:[%s0 + $0x38] sm:$0xf]
  %v30 = vld [vmem:[%s0 + $0x3c] sm:$0xf]
  %v31 = vld [vmem:[%s1] sm:$0xf]
  %v32 = vld [vmem:[%s1 + $0x4] sm:$0xf]
  %v33 = vld [vmem:[%s2] sm:$0x1]
  %v34 = vperm.slane %v33, 0
  %v51 = vunpack.c.l.b16 %v15
  %v52 = vunpack.c.l.b16 %v16
  %v53 = vunpack.c.l.b16 %v17
  %v54 = vunpack.c.l.b16 %v18
  %v55 = vunpack.c.l.b16 %v19
  %v56 = vunpack.c.l.b16 %v20
  %v57 = vunpack.c.l.b16 %v21
  %v58 = vunpack.c.l.b16 %v22
  %v59 = vunpack.c.l.b16 %v23
  %v60 = vunpack.c.l.b16 %v24
  %v61 = vunpack.c.l.b16 %v25
  %v62 = vunpack.c.l.b16 %v26
  %v63 = vunpack.c.l.b16 %v27
  %v64 = vunpack.c.l.b16 %v28
  %v65 = vunpack.c.l.b16 %v29
  %v66 = vunpack.c.l.b16 %v30
  %v67 = vpack.c.b16 %v52, %v51
  %v68 = vpack.c.b16 %v54, %v53
  %v69 = vpack.c.b16 %v56, %v55
  %v70 = vpack.c.b16 %v58, %v57
  %v71 = vpack.c.b16 %v60, %v59
  %v72 = vpack.c.b16 %v62, %v61
  %v73 = vpack.c.b16 %v64, %v63
  %v74 = vpack.c.b16 %v66, %v65
  %v77 = vunpack.c.l.b16 %v31
  %v78 = vunpack.c.l.b16 %v32
  %v79 = vpack.c.b16 %v78, %v77
  %vm81 = vcmask 130048
  %v83 = vsel %vm81, %v67, 0
  %v86 = vsel %vm81, %v68, 0
  %v89 = vsel %vm81, %v69, 0
  %v92 = vsel %vm81, %v70, 0
  %v95 = vsel %vm81, %v71, 0
  %v98 = vsel %vm81, %v72, 0
  %v101 = vsel %vm81, %v73, 0
  %v104 = vsel %vm81, %v74, 0
  %106 = vmatpush.bf16.msra.mxu0 0
  %107 = vmatpush.bf16.msra.mxu0 0
  %108 = vmatpush.bf16.msra.mxu0 0
  %109 = vmatpush.bf16.msra.mxu0 0
  %110 = vmatpush.bf16.msra.mxu0 0
  %111 = vmatpush.bf16.msra.mxu0 0
  %112 = vmatpush.bf16.msra.mxu0 0
  %113 = vmatpush.bf16.msra.mxu0 %v79
  %114 = vmatmul.bf16.gmra.mxu0 %v83
  %v115 = vpop.f32.mrf.mxu0
  %v116 = vadd.f32 %v34, %v115
  %v117 = vpop.f32.mrf.mxu0
  %v118 = vadd.f32 %v34, %v117
  %119 = vmatmul.bf16.gmra.mxu0 %v86
  %v120 = vpop.f32.mrf.mxu0
  %v121 = vadd.f32 %v34, %v120
  %v122 = vpop.f32.mrf.mxu0
  %v123 = vadd.f32 %v34, %v122
  %124 = vmatmul.bf16.gmra.mxu0 %v89
  %v125 = vpop.f32.mrf.mxu0
  %v126 = vadd.f32 %v34, %v125
  %v127 = vpop.f32.mrf.mxu0
  %v128 = vadd.f32 %v34, %v127
  %129 = vmatmul.bf16.gmra.mxu0 %v92
  %v130 = vpop.f32.mrf.mxu0
  %v131 = vadd.f32 %v34, %v130
  %v132 = vpop.f32.mrf.mxu0
  %v133 = vadd.f32 %v34, %v132
  %134 = vmatmul.bf16.gmra.mxu0 %v95
  %v135 = vpop.f32.mrf.mxu0
  %v136 = vadd.f32 %v34, %v135
  %v137 = vpop.f32.mrf.mxu0
  %v138 = vadd.f32 %v34, %v137
  %139 = vmatmul.bf16.gmra.mxu0 %v98
  %v140 = vpop.f32.mrf.mxu0
  %v141 = vadd.f32 %v34, %v140
  %v142 = vpop.f32.mrf.mxu0
  %v143 = vadd.f32 %v34, %v142
  %144 = vmatmul.bf16.gmra.mxu0 %v101
  %v145 = vpop.f32.mrf.mxu0
  %v146 = vadd.f32 %v34, %v145
  %v147 = vpop.f32.mrf.mxu0
  %v148 = vadd.f32 %v34, %v147
  %149 = vmatmul.bf16.gmra.mxu0 %v104
  %v150 = vpop.f32.mrf.mxu0
  %v151 = vadd.f32 %v34, %v150
  %v152 = vpop.f32.mrf.mxu0
  %v153 = vadd.f32 %v34, %v152
  %154 = vdwg.mxu0
  %v155 = vmax.f32 %v116, 0.0
  %v156 = vmax.f32 %v118, 0.0
  %v157 = vmax.f32 %v121, 0.0
  %v158 = vmax.f32 %v123, 0.0
  %v159 = vmax.f32 %v126, 0.0
  %v160 = vmax.f32 %v128, 0.0
  %v161 = vmax.f32 %v131, 0.0
  %v162 = vmax.f32 %v133, 0.0
  %v163 = vmax.f32 %v136, 0.0
  %v164 = vmax.f32 %v138, 0.0
  %v165 = vmax.f32 %v141, 0.0
  %v166 = vmax.f32 %v143, 0.0
  %v167 = vmax.f32 %v146, 0.0
  %v168 = vmax.f32 %v148, 0.0
  %v169 = vmax.f32 %v151, 0.0
  %v170 = vmax.f32 %v153, 0.0
  %v171 = vpack.c.bf16 %v156, %v155
  %v172 = vpack.c.bf16 %v158, %v157
  %v173 = vpack.c.bf16 %v160, %v159
  %v174 = vpack.c.bf16 %v162, %v161
  %v175 = vpack.c.bf16 %v164, %v163
  %v176 = vpack.c.bf16 %v166, %v165
  %v177 = vpack.c.bf16 %v168, %v167
  %v178 = vpack.c.bf16 %v170, %v169
  %v179 = vld [vmem:[%s1 + $0x8] sm:$0xf]
  %v180 = vld [vmem:[%s1 + $0xc] sm:$0xf]
  %v181 = vld [vmem:[%s1 + $0x10] sm:$0xf]
  %v182 = vld [vmem:[%s1 + $0x14] sm:$0xf]
  %v183 = vld [vmem:[%s1 + $0x18] sm:$0xf]
  %v184 = vld [vmem:[%s1 + $0x1c] sm:$0xf]
  %v185 = vld [vmem:[%s1 + $0x20] sm:$0xf]
  %v186 = vld [vmem:[%s1 + $0x24] sm:$0xf]
  %v187 = vld [vmem:[%s1 + $0x28] sm:$0xf]
  %v188 = vld [vmem:[%s1 + $0x2c] sm:$0xf]
  %v189 = vld [vmem:[%s1 + $0x30] sm:$0xf]
  %v190 = vld [vmem:[%s1 + $0x34] sm:$0xf]
  %v191 = vld [vmem:[%s1 + $0x38] sm:$0xf]
  %v192 = vld [vmem:[%s1 + $0x3c] sm:$0xf]
  %v193 = vld [vmem:[%s1 + $0x40] sm:$0xf]
  %v194 = vld [vmem:[%s1 + $0x44] sm:$0xf]
  %v195 = vld [vmem:[%s2 + $0x1] sm:$0x1]
  %v196 = vperm.slane %v195, 0
  %v213 = vunpack.c.l.b16 %v179
  %v214 = vunpack.c.l.b16 %v180
  %v215 = vunpack.c.l.b16 %v181
  %v216 = vunpack.c.l.b16 %v182
  %v217 = vunpack.c.l.b16 %v183
  %v218 = vunpack.c.l.b16 %v184
  %v219 = vunpack.c.l.b16 %v185
  %v220 = vunpack.c.l.b16 %v186
  %v221 = vunpack.c.l.b16 %v187
  %v222 = vunpack.c.l.b16 %v188
  %v223 = vunpack.c.l.b16 %v189
  %v224 = vunpack.c.l.b16 %v190
  %v225 = vunpack.c.l.b16 %v191
  %v226 = vunpack.c.l.b16 %v192
  %v227 = vunpack.c.l.b16 %v193
  %v228 = vunpack.c.l.b16 %v194
  %v229 = vpack.c.b16 %v214, %v213
  %v230 = vpack.c.b16 %v216, %v215
  %v231 = vpack.c.b16 %v218, %v217
  %v232 = vpack.c.b16 %v220, %v219
  %v233 = vpack.c.b16 %v222, %v221
  %v234 = vpack.c.b16 %v224, %v223
  %v235 = vpack.c.b16 %v226, %v225
  %v236 = vpack.c.b16 %v228, %v227
  %245 = vmatpush.bf16.msra.mxu0 %v236
  %246 = vmatpush.bf16.msra.mxu0 %v235
  %247 = vmatpush.bf16.msra.mxu0 %v234
  %248 = vmatpush.bf16.msra.mxu0 %v233
  %249 = vmatpush.bf16.msra.mxu0 %v232
  %250 = vmatpush.bf16.msra.mxu0 %v231
  %251 = vmatpush.bf16.msra.mxu0 %v230
  %252 = vmatpush.bf16.msra.mxu0 %v229
  %253 = vmatmul.bf16.gmra.mxu0 %v171
  %v254 = vpop.f32.mrf.mxu0
  %v255 = vadd.f32 %v196, %v254
  %v256 = vpop.f32.mrf.mxu0
  %v257 = vadd.f32 %v196, %v256
  %258 = vmatmul.bf16.gmra.mxu0 %v172
  %v259 = vpop.f32.mrf.mxu0
  %v260 = vadd.f32 %v196, %v259
  %v261 = vpop.f32.mrf.mxu0
  %v262 = vadd.f32 %v196, %v261
  %263 = vmatmul.bf16.gmra.mxu0 %v173
  %v264 = vpop.f32.mrf.mxu0
  %v265 = vadd.f32 %v196, %v264
  %v266 = vpop.f32.mrf.mxu0
  %v267 = vadd.f32 %v196, %v266
  %268 = vmatmul.bf16.gmra.mxu0 %v174
  %v269 = vpop.f32.mrf.mxu0
  %v270 = vadd.f32 %v196, %v269
  %v271 = vpop.f32.mrf.mxu0
  %v272 = vadd.f32 %v196, %v271
  %273 = vmatmul.bf16.gmra.mxu0 %v175
  %v274 = vpop.f32.mrf.mxu0
  %v275 = vadd.f32 %v196, %v274
  %v276 = vpop.f32.mrf.mxu0
  %v277 = vadd.f32 %v196, %v276
  %278 = vmatmul.bf16.gmra.mxu0 %v176
  %v279 = vpop.f32.mrf.mxu0
  %v280 = vadd.f32 %v196, %v279
  %v281 = vpop.f32.mrf.mxu0
  %v282 = vadd.f32 %v196, %v281
  %283 = vmatmul.bf16.gmra.mxu0 %v177
  %v284 = vpop.f32.mrf.mxu0
  %v285 = vadd.f32 %v196, %v284
  %v286 = vpop.f32.mrf.mxu0
  %v287 = vadd.f32 %v196, %v286
  %288 = vmatmul.bf16.gmra.mxu0 %v178
  %v289 = vpop.f32.mrf.mxu0
  %v290 = vadd.f32 %v196, %v289
  %v291 = vpop.f32.mrf.mxu0
  %v292 = vadd.f32 %v196, %v291
  %293 = vdwg.mxu0
  %v294 = vmax.f32 %v255, 0.0
  %v295 = vmax.f32 %v257, 0.0
  %v296 = vmax.f32 %v260, 0.0
  %v297 = vmax.f32 %v262, 0.0
  %v298 = vmax.f32 %v265, 0.0
  %v299 = vmax.f32 %v267, 0.0
  %v300 = vmax.f32 %v270, 0.0
  %v301 = vmax.f32 %v272, 0.0
  %v302 = vmax.f32 %v275, 0.0
  %v303 = vmax.f32 %v277, 0.0
  %v304 = vmax.f32 %v280, 0.0
  %v305 = vmax.f32 %v282, 0.0
  %v306 = vmax.f32 %v285, 0.0
  %v307 = vmax.f32 %v287, 0.0
  %v308 = vmax.f32 %v290, 0.0
  %v309 = vmax.f32 %v292, 0.0
  %v310 = vpack.c.bf16 %v295, %v294
  %v311 = vpack.c.bf16 %v297, %v296
  %v312 = vpack.c.bf16 %v299, %v298
  %v313 = vpack.c.bf16 %v301, %v300
  %v314 = vpack.c.bf16 %v303, %v302
  %v315 = vpack.c.bf16 %v305, %v304
  %v316 = vpack.c.bf16 %v307, %v306
  %v317 = vpack.c.bf16 %v309, %v308
  %v318 = vld [vmem:[%s1 + $0x48] sm:$0xf]
  %v319 = vld [vmem:[%s1 + $0x4c] sm:$0xf]
  %v320 = vld [vmem:[%s1 + $0x50] sm:$0xf]
  %v321 = vld [vmem:[%s1 + $0x54] sm:$0xf]
  %v322 = vld [vmem:[%s1 + $0x58] sm:$0xf]
  %v323 = vld [vmem:[%s1 + $0x5c] sm:$0xf]
  %v324 = vld [vmem:[%s1 + $0x60] sm:$0xf]
  %v325 = vld [vmem:[%s1 + $0x64] sm:$0xf]
  %v326 = vld [vmem:[%s1 + $0x68] sm:$0xf]
  %v327 = vld [vmem:[%s1 + $0x6c] sm:$0xf]
  %v328 = vld [vmem:[%s1 + $0x70] sm:$0xf]
  %v329 = vld [vmem:[%s1 + $0x74] sm:$0xf]
  %v330 = vld [vmem:[%s1 + $0x78] sm:$0xf]
  %v331 = vld [vmem:[%s1 + $0x7c] sm:$0xf]
  %v332 = vld [vmem:[%s1 + $0x80] sm:$0xf]
  %v333 = vld [vmem:[%s1 + $0x84] sm:$0xf]
  %v334 = vld [vmem:[%s2 + $0x2] sm:$0x1]
  %v335 = vperm.slane %v334, 0
  %v352 = vunpack.c.l.b16 %v318
  %v353 = vunpack.c.l.b16 %v319
  %v354 = vunpack.c.l.b16 %v320
  %v355 = vunpack.c.l.b16 %v321
  %v356 = vunpack.c.l.b16 %v322
  %v357 = vunpack.c.l.b16 %v323
  %v358 = vunpack.c.l.b16 %v324
  %v359 = vunpack.c.l.b16 %v325
  %v360 = vunpack.c.l.b16 %v326
  %v361 = vunpack.c.l.b16 %v327
  %v362 = vunpack.c.l.b16 %v328
  %v363 = vunpack.c.l.b16 %v329
  %v364 = vunpack.c.l.b16 %v330
  %v365 = vunpack.c.l.b16 %v331
  %v366 = vunpack.c.l.b16 %v332
  %v367 = vunpack.c.l.b16 %v333
  %v368 = vpack.c.b16 %v353, %v352
  %v369 = vpack.c.b16 %v355, %v354
  %v370 = vpack.c.b16 %v357, %v356
  %v371 = vpack.c.b16 %v359, %v358
  %v372 = vpack.c.b16 %v361, %v360
  %v373 = vpack.c.b16 %v363, %v362
  %v374 = vpack.c.b16 %v365, %v364
  %v375 = vpack.c.b16 %v367, %v366
  %384 = vmatpush.bf16.msra.mxu0 %v375
  %385 = vmatpush.bf16.msra.mxu0 %v374
  %386 = vmatpush.bf16.msra.mxu0 %v373
  %387 = vmatpush.bf16.msra.mxu0 %v372
  %388 = vmatpush.bf16.msra.mxu0 %v371
  %389 = vmatpush.bf16.msra.mxu0 %v370
  %390 = vmatpush.bf16.msra.mxu0 %v369
  %391 = vmatpush.bf16.msra.mxu0 %v368
  %392 = vmatmul.bf16.gmra.mxu0 %v310
  %v393 = vpop.f32.mrf.mxu0
  %v394 = vadd.f32 %v335, %v393
  %v395 = vpop.f32.mrf.mxu0
  %v396 = vadd.f32 %v335, %v395
  %397 = vmatmul.bf16.gmra.mxu0 %v311
  %v398 = vpop.f32.mrf.mxu0
  %v399 = vadd.f32 %v335, %v398
  %v400 = vpop.f32.mrf.mxu0
  %v401 = vadd.f32 %v335, %v400
  %402 = vmatmul.bf16.gmra.mxu0 %v312
  %v403 = vpop.f32.mrf.mxu0
  %v404 = vadd.f32 %v335, %v403
  %v405 = vpop.f32.mrf.mxu0
  %v406 = vadd.f32 %v335, %v405
  %407 = vmatmul.bf16.gmra.mxu0 %v313
  %v408 = vpop.f32.mrf.mxu0
  %v409 = vadd.f32 %v335, %v408
  %v410 = vpop.f32.mrf.mxu0
  %v411 = vadd.f32 %v335, %v410
  %412 = vmatmul.bf16.gmra.mxu0 %v314
  %v413 = vpop.f32.mrf.mxu0
  %v414 = vadd.f32 %v335, %v413
  %v415 = vpop.f32.mrf.mxu0
  %v416 = vadd.f32 %v335, %v415
  %417 = vmatmul.bf16.gmra.mxu0 %v315
  %v418 = vpop.f32.mrf.mxu0
  %v419 = vadd.f32 %v335, %v418
  %v420 = vpop.f32.mrf.mxu0
  %v421 = vadd.f32 %v335, %v420
  %422 = vmatmul.bf16.gmra.mxu0 %v316
  %v423 = vpop.f32.mrf.mxu0
  %v424 = vadd.f32 %v335, %v423
  %v425 = vpop.f32.mrf.mxu0
  %v426 = vadd.f32 %v335, %v425
  %427 = vmatmul.bf16.gmra.mxu0 %v317
  %v428 = vpop.f32.mrf.mxu0
  %v429 = vadd.f32 %v335, %v428
  %v430 = vpop.f32.mrf.mxu0
  %v431 = vadd.f32 %v335, %v430
  %432 = vdwg.mxu0
  %433 = vxpose.xlu0.b32.start [1/16] %v394, 128
  %434 = vxpose.xlu0.b32.cont [2/16] %v396, 128
  %435 = vxpose.xlu0.b32.cont [3/16] %v399, 128
  %436 = vxpose.xlu0.b32.cont [4/16] %v401, 128
  %437 = vxpose.xlu0.b32.cont [5/16] %v404, 128
  %438 = vxpose.xlu0.b32.cont [6/16] %v406, 128
  %439 = vxpose.xlu0.b32.cont [7/16] %v409, 128
  %440 = vxpose.xlu0.b32.cont [8/16] %v411, 128
  %441 = vxpose.xlu0.b32.cont [9/16] %v414, 128
  %442 = vxpose.xlu0.b32.cont [10/16] %v416, 128
  %443 = vxpose.xlu0.b32.cont [11/16] %v419, 128
  %444 = vxpose.xlu0.b32.cont [12/16] %v421, 128
  %445 = vxpose.xlu0.b32.cont [13/16] %v424, 128
  %446 = vxpose.xlu0.b32.cont [14/16] %v426, 128
  %447 = vxpose.xlu0.b32.cont [15/16] %v429, 128
  %448 = vxpose.xlu0.b32.end [16/16] %v431, 128
  %v449 = vpop.trf.xlu0
  %v450 = vpop.trf.xlu0
  %v451 = vpop.trf.xlu0
  %v452 = vpop.trf.xlu0
  %v453 = vpop.trf.xlu0
  %v454 = vpop.trf.xlu0
  %v455 = vpop.trf.xlu0
  %v456 = vpop.trf.xlu0
  %v457 = vpop.trf.xlu0
  %v458 = vpop.trf.xlu0
  %v459 = vpop.trf.xlu0
  %v460 = vpop.trf.xlu0
  %v461 = vpop.trf.xlu0
  %v462 = vpop.trf.xlu0
  %v463 = vpop.trf.xlu0
  %v464 = vpop.trf.xlu0
  %465 = vst [vmem:[%s3] sm:$0xff] %v449
  // Predicated region
  $region14: #{policy_net_forward.1} parent=0 // pred_check
    _
  $region15: #{policy_net_forward.1} parent=0 // pred_check_branch
    %467 = sbr.rel (0) target = $region17
  $region16: #{policy_net_forward.1} parent=0 // pred_region
    _
  $region17: #{policy_net_forward.1} parent=0 // pred_fallthru
    _
  // Predicated region
  $region18: #{policy_net_forward.1} parent=0 // pred_check
    _
  $region19: #{policy_net_forward.1} parent=0 // pred_check_branch
    %469 = sbr.rel (0) target = $region21
  $region20: #{policy_net_forward.1} parent=0 // pred_region
    _
  $region21: #{policy_net_forward.1} parent=0 // pred_fallthru
    _

</llo_original>
